<compile_context>
chip_gen: v7x
topology: tpu7x:2x2x1
jax: 0.10.0
libtpu: 0.0.40
codegen_flags: <defaults>
</compile_context>

<pallas_src>
import functools

import jax
import jax.numpy as jnp
from jax.experimental import pallas as pl
from jax.experimental.pallas import tpu as pltpu


def _attn_kernel(x_ref, w_ref, b_ref, cq_ref, sq_ref, ck_ref, sk_ref,
                 mask_ref, o_ref, *, d: int):
    """One (batch, head) tile: fused QKV proj + rotation + masked softmax attention."""
    x = x_ref[0]                                              # (n_t, C) bf16

    # Single fused projection for this head: (n_t, C) @ (C, 3d) -> (n_t, 3d), f32 acc.
    qkv = jnp.dot(x, w_ref[...], preferred_element_type=jnp.float32)
    qkv = qkv + b_ref[...]                                    # bias broadcast over rows
    q = qkv[:, :d]
    k = qkv[:, d:2 * d]
    v = qkv[:, 2 * d:]

    # Interleaved pair swap on the XLU: swap(t)[2i] = t[2i+1], swap(t)[2i+1] = t[2i].
    # (The -1 sign on even lanes is folded into the sin coefficient tables.)
    n_t = q.shape[0]
    lane = jax.lax.broadcasted_iota(jnp.int32, (n_t, d), 1)
    even = (lane & 1) == 0
    q_sw = jnp.where(even, pltpu.roll(q, d - 1, axis=1), pltpu.roll(q, 1, axis=1))
    k_sw = jnp.where(even, pltpu.roll(k, d - 1, axis=1), pltpu.roll(k, 1, axis=1))

    # Rotation with host-precomputed coefficients; the q-side also carries 1/sqrt(2d).
    q = q * cq_ref[...] + q_sw * sq_ref[...]
    k = k * ck_ref[...] + k_sw * sk_ref[...]

    # Scores (n_t, n_t): bf16 operands, f32 accumulation; scale already folded into q.
    s = jax.lax.dot_general(q.astype(jnp.bfloat16), k.astype(jnp.bfloat16),
                            (((1,), (1,)), ((), ())),
                            preferred_element_type=jnp.float32)
    valid = mask_ref[0].astype(jnp.float32)                   # int8 -> f32 (layout-safe)
    s = jnp.where(valid != 0.0, s, -1e30)                     # finite bias: NaN-safe

    # Softmax with deferred normalization.
    s_max = jnp.max(s, axis=-1, keepdims=True)
    p = jnp.exp(s - s_max)
    denom = jnp.sum(p, axis=-1, keepdims=True)

    o = jnp.dot(p.astype(jnp.bfloat16), v.astype(jnp.bfloat16),
                preferred_element_type=jnp.float32)           # (n_t, d)
    o = o * pl.reciprocal(denom, approx=True)
    o_ref[0] = o.astype(o_ref.dtype)


@functools.partial(jax.jit, static_argnames=("num_head",))
def attention_forward(x, w_qkv, b_qkv, pe, mask, num_head):
    """x: (n_b, n_t, C); w_qkv: (3C, C) torch layout; b_qkv: (3C,);
    pe: 3 x (1, 1, n_t, d); mask: (1, n_b, n_t, n_t) bool (True = attend) or None."""
    n_b, n_t, C = x.shape
    nh = num_head
    d = C // nh
    assert C % nh == 0 and d % 2 == 0
    scale = 1.0 / float((2 * d) ** 0.5)

    # --- host-side weight layout: per-head fused [Wq_h | Wk_h | Wv_h] slabs ---
    w_t = jnp.transpose(w_qkv).astype(jnp.float32)            # (C, 3C)
    wq = w_t[:, :C].reshape(C, nh, d)
    wk = w_t[:, C:2 * C].reshape(C, nh, d)
    wv = w_t[:, 2 * C:].reshape(C, nh, d)
    w3 = jnp.concatenate([wq, wk, wv], axis=-1).reshape(C, nh * 3 * d)
    w3 = w3.astype(jnp.bfloat16)                              # bf16 MXU operand

    bq = b_qkv[:C].reshape(nh, d)
    bk = b_qkv[C:2 * C].reshape(nh, d)
    bv = b_qkv[2 * C:].reshape(nh, d)
    b3 = jnp.concatenate([bq, bk, bv], axis=-1).reshape(1, nh * 3 * d).astype(jnp.float32)

    # --- rotation coefficients: fold the +-1 sign, pe2 scaling and score scale ---
    pe0 = pe[0].reshape(n_t, d).astype(jnp.float32)
    pe1 = pe[1].reshape(n_t, d).astype(jnp.float32)
    pe2 = pe[2].reshape(n_t, d).astype(jnp.float32)
    sign = jnp.where((jnp.arange(d) % 2) == 0, -1.0, 1.0).astype(jnp.float32)
    cos_q = pe0 * pe2 * scale
    sin_q = pe1 * pe2 * scale * sign
    cos_k = pe0 / pe2
    sin_k = (pe1 / pe2) * sign

    # --- mask as int8 (True = attend) ---
    if mask is None:
        mask_i = jnp.ones((n_b, n_t, n_t), jnp.int8)
    else:
        mask_i = mask.reshape(n_b, n_t, n_t).astype(jnp.int8)

    x_bf = x.astype(jnp.bfloat16)

    # --- advisory cost & VMEM budget ---
    flops = n_b * nh * (2 * n_t * C * 3 * d       # fused qkv projection
                        + 2 * n_t * n_t * d       # q @ k^T
                        + 2 * n_t * n_t * d)      # p @ v
    cost = pl.CostEstimate(
        flops=flops,
        transcendentals=n_b * nh * (n_t * n_t + n_t),
        bytes_accessed=(n_b * n_t * C * 2                 # x, fetched once per batch (bf16)
                        + n_b * nh * C * 3 * d * 2        # per-head weight slab per step
                        + nh * 3 * d * 4                  # biases
                        + 4 * n_t * d * 4                 # rotation coefficient tables
                        + n_b * n_t * n_t * 1             # int8 mask, once per batch
                        + n_b * n_t * C * x.dtype.itemsize))  # output

    bytes_per_step = (
        2 * (n_t * C * 2)                        # x block (bf16, double-buffered)
        + 2 * (C * 3 * d * 2)                    # weight slab (bf16, double-buffered)
        + 2 * (3 * d * 4)                        # bias
        + 4 * (n_t * d * 4)                      # rotation tables (resident)
        + 2 * (n_t * n_t * 1)                    # mask block
        + 2 * (n_t * d * x.dtype.itemsize)       # output block
        + 3 * (n_t * n_t * 4)                    # s / p intermediates (f32)
        + 6 * (n_t * 3 * d * 4))                 # qkv / q / k / v / swaps (f32)
    vmem_limit = int(min(64 * 1024 * 1024, max(32 * 1024 * 1024, 2 * bytes_per_step)))

    kernel = functools.partial(_attn_kernel, d=d)
    out = pl.pallas_call(
        kernel,
        out_shape=jax.ShapeDtypeStruct((n_b, n_t, C), x.dtype),
        # Batch outermost, heads innermost: x and mask blocks stay VMEM-resident
        # across the head loop; only the small (C, 3d) weight slab is re-fetched.
        grid=(n_b, nh),
        in_specs=[
            pl.BlockSpec((1, n_t, C), lambda b, h: (b, 0, 0)),     # x (bf16)
            pl.BlockSpec((C, 3 * d), lambda b, h: (0, h)),         # fused per-head W
            pl.BlockSpec((1, 3 * d), lambda b, h: (0, h)),         # fused per-head bias
            pl.BlockSpec((n_t, d), lambda b, h: (0, 0)),           # cos_q (scaled)
            pl.BlockSpec((n_t, d), lambda b, h: (0, 0)),           # sin_q (signed+scaled)
            pl.BlockSpec((n_t, d), lambda b, h: (0, 0)),           # cos_k
            pl.BlockSpec((n_t, d), lambda b, h: (0, 0)),           # sin_k (signed)
            pl.BlockSpec((1, n_t, n_t), lambda b, h: (b, 0, 0)),   # mask (int8)
        ],
        # Output written directly in final (n_b, n_t, C) layout, lane-dense d=128.
        out_specs=pl.BlockSpec((1, n_t, d), lambda b, h: (b, 0, h)),
        compiler_params=pltpu.CompilerParams(
            dimension_semantics=("parallel", "parallel"),
            vmem_limit_bytes=vmem_limit),
        cost_estimate=cost,
    )(x_bf, w3, b3, cos_q, sin_q, cos_k, sin_k, mask_i)
    return out


def attention_ref(x, w_qkv, b_qkv, pe, mask, num_head):
    """Plain-JAX f32 reference mirroring the PyTorch module (highest precision)."""
    n_b, n_t, C = x.shape
    nh = num_head
    d = C // nh
    hp = jax.lax.Precision.HIGHEST

    qkv = jnp.dot(x, w_qkv.T, precision=hp) + b_qkv
    q, k, v = jnp.split(qkv, 3, axis=-1)

    def heads(t):
        return t.reshape(n_b, n_t, nh, d).transpose(2, 0, 1, 3)   # (nh, n_b, n_t, d)

    q, k, v = heads(q), heads(k), heads(v)

    def rotate(t):
        ev, od = t[..., 0::2], t[..., 1::2]
        return jnp.stack([-od, ev], axis=-1).reshape(t.shape)

    pe0, pe1, pe2 = pe
    q = (q * pe0 + rotate(q) * pe1) * pe2
    k = (k * pe0 + rotate(k) * pe1) / pe2

    scale = 1.0 / float((2 * d) ** 0.5)
    s = jnp.einsum("hbtd,hbsd->hbts", q, k, precision=hp) * scale
    if mask is not None:
        s = jnp.where(mask, s, -jnp.inf)
    alpha = jax.nn.softmax(s, axis=-1)
    o = jnp.einsum("hbts,hbsd->hbtd", alpha, v, precision=hp)
    return o.transpose(1, 2, 0, 3).reshape(n_b, n_t, C)


if __name__ == "__main__":
    # Small shapes consistent with Attention(channel, num_head): d = channel//nh = 128.
    n_b, n_t = 2, 16
    channel, num_head = 256, 2
    d = channel // num_head

    key = jax.random.PRNGKey(0)
    kx, kw, kb, kp = jax.random.split(key, 4)

    x = jax.random.normal(kx, (n_b, n_t, channel), jnp.float32)
    bound = 1.0 / (channel ** 0.5)
    w_qkv = jax.random.uniform(kw, (3 * channel, channel), jnp.float32,
                               minval=-bound, maxval=bound)
    b_qkv = jax.random.uniform(kb, (3 * channel,), jnp.float32,
                               minval=-bound, maxval=bound)

    # Rotary-style position encoding, shape (1, 1, n_t, d) each.
    pos = jnp.arange(n_t, dtype=jnp.float32)[:, None]
    inv_freq = 1.0 / (10000.0 ** (jnp.arange(0, d, 2, dtype=jnp.float32) / d))
    ang = jnp.repeat(pos * inv_freq[None, :], 2, axis=-1)          # (n_t, d)
    pe = (jnp.cos(ang)[None, None],
          jnp.sin(ang)[None, None],
          1.0 + 0.1 * jax.random.uniform(kp, (1, 1, n_t, d), jnp.float32))

    # Boolean key-padding mask (1, n_b, n_t, n_t); True = attend (SDPA semantics).
    valid_len = jnp.array([n_t, n_t - 4])
    keep = jnp.arange(n_t)[None, :] < valid_len[:, None]           # (n_b, n_t)
    mask = jnp.broadcast_to(keep[:, None, :], (n_b, n_t, n_t))[None]

    out = attention_forward(x, w_qkv, b_qkv, pe, mask, num_head)
    out = jax.block_until_ready(out)

    ref = attention_ref(x, w_qkv, b_qkv, pe, mask, num_head)
    assert out.shape == (n_b, n_t, channel)
    assert not bool(jnp.any(jnp.isnan(out)))
    err = float(jnp.max(jnp.abs(out - ref)))
    # Tolerance accounts for bf16 MXU operands (f32 accumulation) + approx reciprocal.
    assert err < 3e-2, f"max abs error {err}"
    print("KERNEL_OK")
</pallas_src>

<mosaic_0001>
module attributes {stable_mosaic.version = 11 : i64} {
  func.func @_attn_kernel(%arg0: i32, %arg1: i32, %arg2: memref<1x16x256xbf16, #tpu.memory_space<vmem>>, %arg3: memref<256x384xbf16, #tpu.memory_space<vmem>>, %arg4: memref<1x384xf32, #tpu.memory_space<vmem>>, %arg5: memref<16x128xf32, #tpu.memory_space<vmem>>, %arg6: memref<16x128xf32, #tpu.memory_space<vmem>>, %arg7: memref<16x128xf32, #tpu.memory_space<vmem>>, %arg8: memref<16x128xf32, #tpu.memory_space<vmem>>, %arg9: memref<1x16x16xi8, #tpu.memory_space<vmem>>, %arg10: memref<1x16x128xf32, #tpu.memory_space<vmem>>) attributes {dimension_semantics = [#tpu.dimension_semantics<parallel>, #tpu.dimension_semantics<parallel>], iteration_bounds = array<i64: 2, 2>, scalar_prefetch = 0 : i64, scratch_operands = 0 : i64, tpu.core_type = #tpu.core_type<tc>, window_params = [{transform_indices = @transform_0, window_bounds = array<i64: 1, 16, 256>}, {transform_indices = @transform_1, window_bounds = array<i64: 256, 384>}, {transform_indices = @transform_2, window_bounds = array<i64: 1, 384>}, {pipeline_mode = #tpu.pipeline_mode<synchronous>, transform_indices = @transform_3, window_bounds = array<i64: 16, 128>}, {pipeline_mode = #tpu.pipeline_mode<synchronous>, transform_indices = @transform_4, window_bounds = array<i64: 16, 128>}, {pipeline_mode = #tpu.pipeline_mode<synchronous>, transform_indices = @transform_5, window_bounds = array<i64: 16, 128>}, {pipeline_mode = #tpu.pipeline_mode<synchronous>, transform_indices = @transform_6, window_bounds = array<i64: 16, 128>}, {transform_indices = @transform_7, window_bounds = array<i64: 1, 16, 16>}, {transform_indices = @transform_8, window_bounds = array<i64: 1, 16, 128>}]} {
    %c0 = arith.constant 0 : index
    %c0_0 = arith.constant 0 : index
    %c0_1 = arith.constant 0 : index
    %0 = vector.load %arg2[%c0, %c0_0, %c0_1] : memref<1x16x256xbf16, #tpu.memory_space<vmem>>, vector<1x16x256xbf16>
    %1 = vector.shape_cast %0 : vector<1x16x256xbf16> to vector<16x256xbf16>
    %c0_2 = arith.constant 0 : index
    %c0_3 = arith.constant 0 : index
    %2 = vector.load %arg3[%c0_2, %c0_3] : memref<256x384xbf16, #tpu.memory_space<vmem>>, vector<256x384xbf16>
    %cst = arith.constant dense<0.000000e+00> : vector<16x384xf32>
    %3 = tpu.matmul %1, %2, %cst {dimension_numbers = #tpu.dot_dimension_numbers<[1], [0], [0], [1], [0, 0, 1, 1], [], []>} : vector<16x256xbf16>, vector<256x384xbf16>, vector<16x384xf32> -> vector<16x384xf32>
    %c0_4 = arith.constant 0 : index
    %c0_5 = arith.constant 0 : index
    %4 = vector.load %arg4[%c0_4, %c0_5] : memref<1x384xf32, #tpu.memory_space<vmem>>, vector<1x384xf32>
    %5 = vector.broadcast %4 : vector<1x384xf32> to vector<16x384xf32>
    %6 = arith.addf %3, %5 : vector<16x384xf32>
    %7 = vector.extract_strided_slice %6 {offsets = [0, 0], sizes = [16, 128], strides = [1, 1]} : vector<16x384xf32> to vector<16x128xf32>
    %8 = vector.extract_strided_slice %6 {offsets = [0, 128], sizes = [16, 128], strides = [1, 1]} : vector<16x384xf32> to vector<16x128xf32>
    %9 = vector.extract_strided_slice %6 {offsets = [0, 256], sizes = [16, 128], strides = [1, 1]} : vector<16x384xf32> to vector<16x128xf32>
    %10 = tpu.iota {dimensions = array<i32: 1>} : vector<16x128xi32>
    %c1_i32 = arith.constant 1 : i32
    %11 = vector.broadcast %c1_i32 : i32 to vector<16x128xi32>
    %12 = arith.andi %10, %11 : vector<16x128xi32>
    %c0_i32 = arith.constant 0 : i32
    %13 = vector.broadcast %c0_i32 : i32 to vector<16x128xi32>
    %14 = arith.cmpi eq, %12, %13 : vector<16x128xi32>
    %c127_i32 = arith.constant 127 : i32
    %15 = tpu.dynamic_rotate %7 by %c127_i32 dim 1 : vector<16x128xf32>, i32 -> vector<16x128xf32>
    %c1_i32_6 = arith.constant 1 : i32
    %16 = tpu.dynamic_rotate %7 by %c1_i32_6 dim 1 : vector<16x128xf32>, i32 -> vector<16x128xf32>
    %17 = arith.select %14, %15, %16 : vector<16x128xi1>, vector<16x128xf32>
    %c127_i32_7 = arith.constant 127 : i32
    %18 = tpu.dynamic_rotate %8 by %c127_i32_7 dim 1 : vector<16x128xf32>, i32 -> vector<16x128xf32>
    %c1_i32_8 = arith.constant 1 : i32
    %19 = tpu.dynamic_rotate %8 by %c1_i32_8 dim 1 : vector<16x128xf32>, i32 -> vector<16x128xf32>
    %20 = arith.select %14, %18, %19 : vector<16x128xi1>, vector<16x128xf32>
    %c0_9 = arith.constant 0 : index
    %c0_10 = arith.constant 0 : index
    %21 = vector.load %arg5[%c0_9, %c0_10] : memref<16x128xf32, #tpu.memory_space<vmem>>, vector<16x128xf32>
    %22 = arith.mulf %7, %21 : vector<16x128xf32>
    %c0_11 = arith.constant 0 : index
    %c0_12 = arith.constant 0 : index
    %23 = vector.load %arg6[%c0_11, %c0_12] : memref<16x128xf32, #tpu.memory_space<vmem>>, vector<16x128xf32>
    %24 = arith.mulf %17, %23 : vector<16x128xf32>
    %25 = arith.addf %22, %24 : vector<16x128xf32>
    %c0_13 = arith.constant 0 : index
    %c0_14 = arith.constant 0 : index
    %26 = vector.load %arg7[%c0_13, %c0_14] : memref<16x128xf32, #tpu.memory_space<vmem>>, vector<16x128xf32>
    %27 = arith.mulf %8, %26 : vector<16x128xf32>
    %c0_15 = arith.constant 0 : index
    %c0_16 = arith.constant 0 : index
    %28 = vector.load %arg8[%c0_15, %c0_16] : memref<16x128xf32, #tpu.memory_space<vmem>>, vector<16x128xf32>
    %29 = arith.mulf %20, %28 : vector<16x128xf32>
    %30 = arith.addf %27, %29 : vector<16x128xf32>
    %31 = arith.truncf %25 : vector<16x128xf32> to vector<16x128xbf16>
    %32 = arith.truncf %30 : vector<16x128xf32> to vector<16x128xbf16>
    %cst_17 = arith.constant dense<0.000000e+00> : vector<16x16xf32>
    %33 = tpu.matmul %31, %32, %cst_17 {dimension_numbers = #tpu.dot_dimension_numbers<[1], [1], [0], [0], [0, 0, 1, 0], [], []>} : vector<16x128xbf16>, vector<16x128xbf16>, vector<16x16xf32> -> vector<16x16xf32>
    %c0_18 = arith.constant 0 : index
    %c0_19 = arith.constant 0 : index
    %c0_20 = arith.constant 0 : index
    %34 = vector.load %arg9[%c0_18, %c0_19, %c0_20] : memref<1x16x16xi8, #tpu.memory_space<vmem>>, vector<1x16x16xi8>
    %35 = vector.shape_cast %34 : vector<1x16x16xi8> to vector<16x16xi8>
    %36 = arith.sitofp %35 : vector<16x16xi8> to vector<16x16xf32>
    %cst_21 = arith.constant 0.000000e+00 : f32
    %37 = vector.broadcast %cst_21 : f32 to vector<16x16xf32>
    %38 = arith.cmpf one, %36, %37 : vector<16x16xf32>
    %cst_22 = arith.constant -1.000000e+30 : f32
    %39 = vector.broadcast %cst_22 : f32 to vector<16x16xf32>
    %40 = arith.select %38, %33, %39 : vector<16x16xi1>, vector<16x16xf32>
    %cst_23 = arith.constant dense<0xFF800000> : vector<16xf32>
    %41 = vector.multi_reduction <maximumf>, %40, %cst_23 [1] : vector<16x16xf32> to vector<16xf32>
    %42 = vector.shape_cast %41 : vector<16xf32> to vector<16x1xf32>
    %43 = vector.broadcast %42 : vector<16x1xf32> to vector<16x16xf32>
    %44 = arith.subf %40, %43 : vector<16x16xf32>
    %45 = math.exp %44 : vector<16x16xf32>
    %cst_24 = arith.constant dense<0.000000e+00> : vector<16xf32>
    %46 = vector.multi_reduction <add>, %45, %cst_24 [1] : vector<16x16xf32> to vector<16xf32>
    %47 = vector.shape_cast %46 : vector<16xf32> to vector<16x1xf32>
    %48 = arith.truncf %45 : vector<16x16xf32> to vector<16x16xbf16>
    %49 = arith.truncf %9 : vector<16x128xf32> to vector<16x128xbf16>
    %cst_25 = arith.constant dense<0.000000e+00> : vector<16x128xf32>
    %50 = tpu.matmul %48, %49, %cst_25 {dimension_numbers = #tpu.dot_dimension_numbers<[1], [0], [0], [1], [0, 0, 1, 1], [], []>} : vector<16x16xbf16>, vector<16x128xbf16>, vector<16x128xf32> -> vector<16x128xf32>
    %51 = tpu.reciprocal %47 {approx = true} : vector<16x1xf32> -> vector<16x1xf32>
    %52 = vector.broadcast %51 : vector<16x1xf32> to vector<16x128xf32>
    %53 = arith.mulf %50, %52 : vector<16x128xf32>
    %c0_26 = arith.constant 0 : index
    %c0_27 = arith.constant 0 : index
    %c0_28 = arith.constant 0 : index
    %54 = vector.load %arg10[%c0_26, %c0_27, %c0_28] : memref<1x16x128xf32, #tpu.memory_space<vmem>>, vector<1x16x128xf32>
    %55 = vector.shape_cast %54 : vector<1x16x128xf32> to vector<16x128xf32>
    %56 = vector.shape_cast %53 : vector<16x128xf32> to vector<1x16x128xf32>
    tpu.vector_store %arg10[%c0_26, %c0_27, %c0_28], %56 {strides = array<i32>} : memref<1x16x128xf32, #tpu.memory_space<vmem>>, vector<1x16x128xf32>,
    return
  }
  func.func @transform_0(%arg0: i32, %arg1: i32) -> (i32, i32, i32) {
    %c0_i32 = arith.constant 0 : i32
    %c0_i32_0 = arith.constant 0 : i32
    %c0_i32_1 = arith.constant 0 : i32
    return %arg0, %c0_i32, %c0_i32_0 : i32, i32, i32
  }
  func.func @transform_1(%arg0: i32, %arg1: i32) -> (i32, i32) {
    %c0_i32 = arith.constant 0 : i32
    %c0_i32_0 = arith.constant 0 : i32
    return %c0_i32, %arg1 : i32, i32
  }
  func.func @transform_2(%arg0: i32, %arg1: i32) -> (i32, i32) {
    %c0_i32 = arith.constant 0 : i32
    %c0_i32_0 = arith.constant 0 : i32
    return %c0_i32, %arg1 : i32, i32
  }
  func.func @transform_3(%arg0: i32, %arg1: i32) -> (i32, i32) {
    %c0_i32 = arith.constant 0 : i32
    %c0_i32_0 = arith.constant 0 : i32
    %c0_i32_1 = arith.constant 0 : i32
    return %c0_i32, %c0_i32_0 : i32, i32
  }
  func.func @transform_4(%arg0: i32, %arg1: i32) -> (i32, i32) {
    %c0_i32 = arith.constant 0 : i32
    %c0_i32_0 = arith.constant 0 : i32
    %c0_i32_1 = arith.constant 0 : i32
    return %c0_i32, %c0_i32_0 : i32, i32
  }
  func.func @transform_5(%arg0: i32, %arg1: i32) -> (i32, i32) {
    %c0_i32 = arith.constant 0 : i32
    %c0_i32_0 = arith.constant 0 : i32
    %c0_i32_1 = arith.constant 0 : i32
    return %c0_i32, %c0_i32_0 : i32, i32
  }
  func.func @transform_6(%arg0: i32, %arg1: i32) -> (i32, i32) {
    %c0_i32 = arith.constant 0 : i32
    %c0_i32_0 = arith.constant 0 : i32
    %c0_i32_1 = arith.constant 0 : i32
    return %c0_i32, %c0_i32_0 : i32, i32
  }
  func.func @transform_7(%arg0: i32, %arg1: i32) -> (i32, i32, i32) {
    %c0_i32 = arith.constant 0 : i32
    %c0_i32_0 = arith.constant 0 : i32
    %c0_i32_1 = arith.constant 0 : i32
    return %arg0, %c0_i32, %c0_i32_0 : i32, i32, i32
  }
  func.func @transform_8(%arg0: i32, %arg1: i32) -> (i32, i32, i32) {
    %c0_i32 = arith.constant 0 : i32
    %c0_i32_0 = arith.constant 0 : i32
    return %arg0, %c0_i32, %arg1 : i32, i32, i32
  }
}

</mosaic_0001>

<llo_original>
// kernel: attention_forward.1
$region0: #{attention_forward.1}
  #allocation0 [shape = 'u32[]', space=smem, size = 0x4, offset = 0x4, fixed_abs, tag = 'smem constant byte address 0x4 - core index']
  #allocation1 [shape = 'u32[144,128]{1,0:T(1,128)}', space=vmem, size = 0x12000, scoped, tag = 'internal scratch']
  %s0 = inlined_call_operand.vmem [shape: bf16[2,16,256], index: 0, kind: input, shape index: {}]
  %s1 = inlined_call_operand.vmem [shape: bf16[256,768], index: 1, kind: input, shape index: {}]
  %s2 = inlined_call_operand.vmem [shape: f32[1,768], index: 2, kind: input, shape index: {}]
  %s3 = inlined_call_operand.vmem [shape: f32[16,128], index: 3, kind: input, shape index: {}]
  %s4 = inlined_call_operand.vmem [shape: f32[16,128], index: 4, kind: input, shape index: {}]
  %s5 = inlined_call_operand.vmem [shape: f32[16,128], index: 5, kind: input, shape index: {}]
  %s6 = inlined_call_operand.vmem [shape: f32[16,128], index: 6, kind: input, shape index: {}]
  %s7 = inlined_call_operand.vmem [shape: s8[2,16,16], index: 7, kind: input, shape index: {}]
  %s8 = inlined_call_operand.hbm [shape: f32[2,16,256], index: 8, kind: output, shape index: {}]
  %s9 = sld [smem:[#allocation0]]
  $region91: #{attention_forward.1} parent=0
    _
  %s11 = ssub.s32 1, %s9
  %s12 = scalar_select 0, %s11, %s9
  $region1: #{attention_forward.1} parent=0
    #allocation2 [shape = 'u8[393216]{0}', space=vmem, size = 0x60000, scoped, tag = 'input window, operand 1']
    #allocation3 [shape = 'u8[16384]{0}', space=vmem, size = 0x4000, scoped, tag = 'output window, operand 0']
    #allocation4 [shape = 's32[2]{0}', space=sflag, size = 0x8, scoped, tag = 'scoped memory for attention_forward.1']
    %13 = vsyncpa [#allocation4], 0
    %s14 = scalar_lea.sflag [#allocation4], 1
    %15 = vsyncpa %s14, 0
    loop: start=0, step=1, limit=6
    $region2: #{attention_forward.1} parent=1 // loop_pre_header
      _
    $region3: #{attention_forward.1} parent=1 // loop_header
      %s17 = sphi 0, %s21
      %p18 = scmp.ge.s32.totalorder %s17, 6
      %s24 = sphi 0, %s36
      %s25 = sphi 0, %s32
      %s26 = sphi 0, %s24
      %s27 = sphi 0, %s25
      %s28 = sphi 0, %s26
      %s29 = sphi 0, %s27
      %s39 = sphi 0, %s41
      %s42 = sphi 0, %s39
      %s43 = sphi 0, %s42
      %s59 = sphi 0, %s43
      %s65 = sphi 0, %s67
      %s68 = sphi 0, %s65
      %s69 = sphi 0, %s68
      %s85 = sphi 0, %s69
      %s91 = sphi 0, %s93
      %s94 = sphi 0, %s91
      %s95 = sphi 0, %s94
      %s111 = sphi 0, %s95
      %s115 = sphi 0, %s115
      %s117 = sphi 0, %s115
      %s118 = sphi 0, %s117
      %s132 = sphi 0, %s118
      %s136 = sphi 0, %s136
      %s138 = sphi 0, %s136
      %s139 = sphi 0, %s138
      %s153 = sphi 0, %s139
      %s157 = sphi 0, %s157
      %s159 = sphi 0, %s157
      %s160 = sphi 0, %s159
      %s174 = sphi 0, %s160
      %s178 = sphi 0, %s178
      %s180 = sphi 0, %s178
      %s181 = sphi 0, %s180
      %s195 = sphi 0, %s181
      %s201 = sphi 0, %s203
      %s204 = sphi 0, %s201
      %s205 = sphi 0, %s204
      %s221 = sphi 0, %s205
      %s229 = sphi 0, %s231
      %s232 = sphi 0, %s229
      %s233 = sphi 0, %s232
      %s249 = sphi 0, %s233
    $region4: #{attention_forward.1} parent=1 // loop_header_branch
      %20 = sbr.rel (%p18) target = $region8
    $region5: #{attention_forward.1} parent=1 // loop_body
      %s22 = ssub.s32 %s17, 1
      %s23 = ssub.s32 %s17, 2
      %s30 = sadd.s32 1, %s25
      %p31 = scmp.ge.s32.totalorder %s30, 2
      %s32 = scalar_select %p31, 0, %s30
      %s33 = sadd.s32 1, %s24
      %s34 = scalar_select %p31, %s33, %s24
      %p35 = scmp.ge.s32.totalorder %s34, 2
      %s36 = scalar_select %p35, 0, %s34
      %s37 = ssub.s32 %s24, %s36
      %p38 = scmp.eq.s32.totalorder %s37, 0
      %s40 = sadd.s32 %s39, 1
      %s41 = scalar_select %p38, %s39, %s40
      %p44 = pneg %p38
      %p45 = scmp.eq.s32.totalorder %s17, 3
      %p46 = por %p44, %p45
      %p47 = scmp.ne.s32.totalorder %s39, %s42
      %p48 = scmp.eq.s32.totalorder %s17, 0
      %p49 = por %p47, %p48
      %p50 = scmp.ne.s32.totalorder %s39, %s42
      %p51 = scmp.eq.s32.totalorder %s22, 3
      %p52 = por %p50, %p51
      %p53 = scmp.ne.s32.totalorder %s42, %s43
      %p54 = scmp.eq.s32.totalorder %s22, 0
      %p55 = por %p53, %p54
      %p56 = scmp.ne.s32.totalorder %s42, %s43
      %p57 = scmp.eq.s32.totalorder %s23, 3
      %p58 = por %p56, %p57
      %p60 = scmp.ne.s32.totalorder %s43, %s59
      %p61 = scmp.eq.s32.totalorder %s23, 0
      %p62 = por %p60, %p61
      %s63 = ssub.s32 %s25, %s32
      %p64 = scmp.eq.s32.totalorder %s63, 0
      %s66 = sadd.s32 %s65, 1
      %s67 = scalar_select %p64, %s65, %s66
      %p70 = pneg %p64
      %p71 = scmp.eq.s32.totalorder %s17, 3
      %p72 = por %p70, %p71
      %p73 = scmp.ne.s32.totalorder %s65, %s68
      %p74 = scmp.eq.s32.totalorder %s17, 0
      %p75 = por %p73, %p74
      %p76 = scmp.ne.s32.totalorder %s65, %s68
      %p77 = scmp.eq.s32.totalorder %s22, 3
      %p78 = por %p76, %p77
      %p79 = scmp.ne.s32.totalorder %s68, %s69
      %p80 = scmp.eq.s32.totalorder %s22, 0
      %p81 = por %p79, %p80
      %p82 = scmp.ne.s32.totalorder %s68, %s69
      %p83 = scmp.eq.s32.totalorder %s23, 3
      %p84 = por %p82, %p83
      %p86 = scmp.ne.s32.totalorder %s69, %s85
      %p87 = scmp.eq.s32.totalorder %s23, 0
      %p88 = por %p86, %p87
      %s89 = ssub.s32 %s25, %s32
      %p90 = scmp.eq.s32.totalorder %s89, 0
      %s92 = sadd.s32 %s91, 1
      %s93 = scalar_select %p90, %s91, %s92
      %p96 = pneg %p90
      %p97 = scmp.eq.s32.totalorder %s17, 3
      %p98 = por %p96, %p97
      %p99 = scmp.ne.s32.totalorder %s91, %s94
      %p100 = scmp.eq.s32.totalorder %s17, 0
      %p101 = por %p99, %p100
      %p102 = scmp.ne.s32.totalorder %s91, %s94
      %p103 = scmp.eq.s32.totalorder %s22, 3
      %p104 = por %p102, %p103
      %p105 = scmp.ne.s32.totalorder %s94, %s95
      %p106 = scmp.eq.s32.totalorder %s22, 0
      %p107 = por %p105, %p106
      %p108 = scmp.ne.s32.totalorder %s94, %s95
      %p109 = scmp.eq.s32.totalorder %s23, 3
      %p110 = por %p108, %p109
      %p112 = scmp.ne.s32.totalorder %s95, %s111
      %p113 = scmp.eq.s32.totalorder %s23, 0
      %p114 = por %p112, %p113
      %s116 = sadd.s32 %s115, 1
      %p119 = scmp.eq.s32.totalorder %s17, 3
      %p120 = scmp.ne.s32.totalorder %s115, %s117
      %p121 = scmp.eq.s32.totalorder %s17, 0
      %p122 = por %p120, %p121
      %p123 = scmp.ne.s32.totalorder %s115, %s117
      %p124 = scmp.eq.s32.totalorder %s22, 3
      %p125 = por %p123, %p124
      %p126 = scmp.ne.s32.totalorder %s117, %s118
      %p127 = scmp.eq.s32.totalorder %s22, 0
      %p128 = por %p126, %p127
      %p129 = scmp.ne.s32.totalorder %s117, %s118
      %p130 = scmp.eq.s32.totalorder %s23, 3
      %p131 = por %p129, %p130
      %p133 = scmp.ne.s32.totalorder %s118, %s132
      %p134 = scmp.eq.s32.totalorder %s23, 0
      %p135 = por %p133, %p134
      %s137 = sadd.s32 %s136, 1
      %p140 = scmp.eq.s32.totalorder %s17, 3
      %p141 = scmp.ne.s32.totalorder %s136, %s138
      %p142 = scmp.eq.s32.totalorder %s17, 0
      %p143 = por %p141, %p142
      %p144 = scmp.ne.s32.totalorder %s136, %s138
      %p145 = scmp.eq.s32.totalorder %s22, 3
      %p146 = por %p144, %p145
      %p147 = scmp.ne.s32.totalorder %s138, %s139
      %p148 = scmp.eq.s32.totalorder %s22, 0
      %p149 = por %p147, %p148
      %p150 = scmp.ne.s32.totalorder %s138, %s139
      %p151 = scmp.eq.s32.totalorder %s23, 3
      %p152 = por %p150, %p151
      %p154 = scmp.ne.s32.totalorder %s139, %s153
      %p155 = scmp.eq.s32.totalorder %s23, 0
      %p156 = por %p154, %p155
      %s158 = sadd.s32 %s157, 1
      %p161 = scmp.eq.s32.totalorder %s17, 3
      %p162 = scmp.ne.s32.totalorder %s157, %s159
      %p163 = scmp.eq.s32.totalorder %s17, 0
      %p164 = por %p162, %p163
      %p165 = scmp.ne.s32.totalorder %s157, %s159
      %p166 = scmp.eq.s32.totalorder %s22, 3
      %p167 = por %p165, %p166
      %p168 = scmp.ne.s32.totalorder %s159, %s160
      %p169 = scmp.eq.s32.totalorder %s22, 0
      %p170 = por %p168, %p169
      %p171 = scmp.ne.s32.totalorder %s159, %s160
      %p172 = scmp.eq.s32.totalorder %s23, 3
      %p173 = por %p171, %p172
      %p175 = scmp.ne.s32.totalorder %s160, %s174
      %p176 = scmp.eq.s32.totalorder %s23, 0
      %p177 = por %p175, %p176
      %s179 = sadd.s32 %s178, 1
      %p182 = scmp.eq.s32.totalorder %s17, 3
      %p183 = scmp.ne.s32.totalorder %s178, %s180
      %p184 = scmp.eq.s32.totalorder %s17, 0
      %p185 = por %p183, %p184
      %p186 = scmp.ne.s32.totalorder %s178, %s180
      %p187 = scmp.eq.s32.totalorder %s22, 3
      %p188 = por %p186, %p187
      %p189 = scmp.ne.s32.totalorder %s180, %s181
      %p190 = scmp.eq.s32.totalorder %s22, 0
      %p191 = por %p189, %p190
      %p192 = scmp.ne.s32.totalorder %s180, %s181
      %p193 = scmp.eq.s32.totalorder %s23, 3
      %p194 = por %p192, %p193
      %p196 = scmp.ne.s32.totalorder %s181, %s195
      %p197 = scmp.eq.s32.totalorder %s23, 0
      %p198 = por %p196, %p197
      %s199 = ssub.s32 %s24, %s36
      %p200 = scmp.eq.s32.totalorder %s199, 0
      %s202 = sadd.s32 %s201, 1
      %s203 = scalar_select %p200, %s201, %s202
      %p206 = pneg %p200
      %p207 = scmp.eq.s32.totalorder %s17, 3
      %p208 = por %p206, %p207
      %p209 = scmp.ne.s32.totalorder %s201, %s204
      %p210 = scmp.eq.s32.totalorder %s17, 0
      %p211 = por %p209, %p210
      %p212 = scmp.ne.s32.totalorder %s201, %s204
      %p213 = scmp.eq.s32.totalorder %s22, 3
      %p214 = por %p212, %p213
      %p215 = scmp.ne.s32.totalorder %s204, %s205
      %p216 = scmp.eq.s32.totalorder %s22, 0
      %p217 = por %p215, %p216
      %p218 = scmp.ne.s32.totalorder %s204, %s205
      %p219 = scmp.eq.s32.totalorder %s23, 3
      %p220 = por %p218, %p219
      %p222 = scmp.ne.s32.totalorder %s205, %s221
      %p223 = scmp.eq.s32.totalorder %s23, 0
      %p224 = por %p222, %p223
      %s225 = ssub.s32 %s24, %s36
      %s226 = ssub.s32 %s25, %s32
      %s227 = sor.u32 %s225, %s226
      %p228 = scmp.eq.s32.totalorder %s227, 0
      %s230 = sadd.s32 %s229, 1
      %s231 = scalar_select %p228, %s229, %s230
      %p234 = pneg %p228
      %p235 = scmp.eq.s32.totalorder %s17, 3
      %p236 = por %p234, %p235
      %p237 = scmp.ne.s32.totalorder %s229, %s232
      %p238 = scmp.eq.s32.totalorder %s17, 0
      %p239 = por %p237, %p238
      %p240 = scmp.ne.s32.totalorder %s229, %s232
      %p241 = scmp.eq.s32.totalorder %s22, 3
      %p242 = por %p240, %p241
      %p243 = scmp.ne.s32.totalorder %s232, %s233
      %p244 = scmp.eq.s32.totalorder %s22, 0
      %p245 = por %p243, %p244
      %p246 = scmp.ne.s32.totalorder %s232, %s233
      %p247 = scmp.eq.s32.totalorder %s23, 3
      %p248 = por %p246, %p247
      %p250 = scmp.ne.s32.totalorder %s233, %s249
      %p251 = scmp.eq.s32.totalorder %s23, 0
      %p252 = por %p250, %p251
      %p253 = scmp.le.s32.totalorder 1, %s17
      %p254 = scmp.lt.s32.totalorder %s17, 5
      %p255 = pnand %p253, %p254
      %p256 = pneg %p255
      // Predicated region
      $region9: #{attention_forward.1} parent=5 // pred_check
        _
      $region10: #{attention_forward.1} parent=5 // pred_check_branch
        %258 = sbr.rel (%p255) target = $region12
      $region11: #{attention_forward.1} parent=5 // pred_region
        %s259 = ssub.s32 %s17, 1
        // Predicated region
        $region13: #{attention_forward.1} parent=11 // pred_check
          %p260 = pneg %p128
        $region14: #{attention_forward.1} parent=11 // pred_check_branch
          %262 = sbr.rel (%p260) target = $region16
        $region15: #{attention_forward.1} parent=11 // pred_region
          _
        $region16: #{attention_forward.1} parent=11 // pred_fallthru
          _
        // Predicated region
        $region17: #{attention_forward.1} parent=11 // pred_check
          %p263 = pneg %p149
        $region18: #{attention_forward.1} parent=11 // pred_check_branch
          %265 = sbr.rel (%p263) target = $region20
        $region19: #{attention_forward.1} parent=11 // pred_region
          _
        $region20: #{attention_forward.1} parent=11 // pred_fallthru
          _
        // Predicated region
        $region21: #{attention_forward.1} parent=11 // pred_check
          %p266 = pneg %p170
        $region22: #{attention_forward.1} parent=11 // pred_check_branch
          %268 = sbr.rel (%p266) target = $region24
        $region23: #{attention_forward.1} parent=11 // pred_region
          _
        $region24: #{attention_forward.1} parent=11 // pred_fallthru
          _
        // Predicated region
        $region25: #{attention_forward.1} parent=11 // pred_check
          %p269 = pneg %p191
        $region26: #{attention_forward.1} parent=11 // pred_check_branch
          %271 = sbr.rel (%p269) target = $region28
        $region27: #{attention_forward.1} parent=11 // pred_region
          _
        $region28: #{attention_forward.1} parent=11 // pred_fallthru
          _
      $region12: #{attention_forward.1} parent=5 // pred_fallthru
        _
      %p272 = scmp.lt.s32.totalorder %s17, 4
      // Predicated region
      $region29: #{attention_forward.1} parent=5 // pred_check
        %p273 = pneg %p272
      $region30: #{attention_forward.1} parent=5 // pred_check_branch
        %275 = sbr.rel (%p273) target = $region32
      $region31: #{attention_forward.1} parent=5 // pred_region
        // Predicated region
        $region33: #{attention_forward.1} parent=31 // pred_check
          %p276 = pneg %p49
        $region34: #{attention_forward.1} parent=31 // pred_check_branch
          %278 = sbr.rel (%p276) target = $region36
        $region35: #{attention_forward.1} parent=31 // pred_region
          %p279 = scmp.lt.s32.totalorder %s24, 1
          %s280 = scalar_select %p279, %s24, 1
          %s281 = smul.addr %s280, 4
          %s282 = smul.addr %s281, 4
          %s283 = scalar_lea.vmem %s0, %s282
        $region36: #{attention_forward.1} parent=31 // pred_fallthru
          _
        // Predicated region
        $region37: #{attention_forward.1} parent=31 // pred_check
          %p284 = pneg %p75
        $region38: #{attention_forward.1} parent=31 // pred_check_branch
          %286 = sbr.rel (%p284) target = $region40
        $region39: #{attention_forward.1} parent=31 // pred_region
          %s287 = sand.u32 %s65, 1
          %s288 = sand.u32 %s65, 1
          %s289 = smul.addr %s288, 384
          %s290 = scalar_lea.vmem [#allocation2], %s289
          %s291 = smul.u32 3, %s25
          %s292 = smul.addr %s291, 4
          %s293 = scalar_lea.vmem %s1, %s292
          // Predicated region
          $region41: #{attention_forward.1} parent=39 // pred_check
            _
          $region42: #{attention_forward.1} parent=39 // pred_check_branch
            %295 = sbr.rel (0) target = $region44
          $region43: #{attention_forward.1} parent=39 // pred_region
            // Predicated region
            $region45: #{attention_forward.1} parent=43 // pred_check
              _
            $region46: #{attention_forward.1} parent=43 // pred_check_branch
              %297 = sbr.rel (0) target = $region48
            $region47: #{attention_forward.1} parent=43 // pred_region
              %s298 = scalar_lea.vmem %s293, 8
              %s299 = scalar_lea.vmem %s290, 8 [#allocation2]
              loop: start=0, step=1, limit=1
              $region49: #{attention_forward.1} parent=47 // loop_pre_header
                _
              $region50: #{attention_forward.1} parent=47 // loop_header
                %s301 = sphi 0, %s305
                %p302 = scmp.ge.s32.totalorder %s301, 1
                %s306 = sphi %s293, %s293
                %s307 = sphi %s290, %s290
              $region51: #{attention_forward.1} parent=47 // loop_header_branch
                %304 = sbr.rel (%p302) target = $region55
              $region52: #{attention_forward.1} parent=47 // loop_body
                %v308 = vld [vmem:[%s306] sm:$0xff]
                %309 = vst [vmem:[%s307] sm:$0xff] %v308
                %v310 = vld [vmem:[%s306 + $0x18] sm:$0xff]
                %311 = vst [vmem:[%s307 + $0xc] sm:$0xff] %v310
                %v312 = vld [vmem:[%s306 + $0x30] sm:$0xff]
                %313 = vst [vmem:[%s307 + $0x18] sm:$0xff] %v312
                %v314 = vld [vmem:[%s306 + $0x48] sm:$0xff]
                %315 = vst [vmem:[%s307 + $0x24] sm:$0xff] %v314
                %v316 = vld [vmem:[%s306 + $0x60] sm:$0xff]
                %317 = vst [vmem:[%s307 + $0x30] sm:$0xff] %v316
                %v318 = vld [vmem:[%s306 + $0x78] sm:$0xff]
                %319 = vst [vmem:[%s307 + $0x3c] sm:$0xff] %v318
                %v320 = vld [vmem:[%s306 + $0x90] sm:$0xff]
                %321 = vst [vmem:[%s307 + $0x48] sm:$0xff] %v320
                %v322 = vld [vmem:[%s306 + $0xa8] sm:$0xff]
                %323 = vst [vmem:[%s307 + $0x54] sm:$0xff] %v322
                %v324 = vld [vmem:[%s306 + $0xc0] sm:$0xff]
                %325 = vst [vmem:[%s307 + $0x60] sm:$0xff] %v324
                %v326 = vld [vmem:[%s306 + $0xd8] sm:$0xff]
                %327 = vst [vmem:[%s307 + $0x6c] sm:$0xff] %v326
                %v328 = vld [vmem:[%s306 + $0xf0] sm:$0xff]
                %329 = vst [vmem:[%s307 + $0x78] sm:$0xff] %v328
                %v330 = vld [vmem:[%s306 + $0x108] sm:$0xff]
                %331 = vst [vmem:[%s307 + $0x84] sm:$0xff] %v330
                %v332 = vld [vmem:[%s306 + $0x120] sm:$0xff]
                %333 = vst [vmem:[%s307 + $0x90] sm:$0xff] %v332
                %v334 = vld [vmem:[%s306 + $0x138] sm:$0xff]
                %335 = vst [vmem:[%s307 + $0x9c] sm:$0xff] %v334
                %v336 = vld [vmem:[%s306 + $0x150] sm:$0xff]
                %337 = vst [vmem:[%s307 + $0xa8] sm:$0xff] %v336
                %v338 = vld [vmem:[%s306 + $0x168] sm:$0xff]
                %339 = vst [vmem:[%s307 + $0xb4] sm:$0xff] %v338
                %v340 = vld [vmem:[%s306 + $0x180] sm:$0xff]
                %341 = vst [vmem:[%s307 + $0xc0] sm:$0xff] %v340
                %v342 = vld [vmem:[%s306 + $0x198] sm:$0xff]
                %343 = vst [vmem:[%s307 + $0xcc] sm:$0xff] %v342
                %v344 = vld [vmem:[%s306 + $0x1b0] sm:$0xff]
                %345 = vst [vmem:[%s307 + $0xd8] sm:$0xff] %v344
                %v346 = vld [vmem:[%s306 + $0x1c8] sm:$0xff]
                %347 = vst [vmem:[%s307 + $0xe4] sm:$0xff] %v346
                %v348 = vld [vmem:[%s306 + $0x1e0] sm:$0xff]
                %349 = vst [vmem:[%s307 + $0xf0] sm:$0xff] %v348
                %v350 = vld [vmem:[%s306 + $0x1f8] sm:$0xff]
                %351 = vst [vmem:[%s307 + $0xfc] sm:$0xff] %v350
                %v352 = vld [vmem:[%s306 + $0x210] sm:$0xff]
                %353 = vst [vmem:[%s307 + $0x108] sm:$0xff] %v352
                %v354 = vld [vmem:[%s306 + $0x228] sm:$0xff]
                %355 = vst [vmem:[%s307 + $0x114] sm:$0xff] %v354
                %v356 = vld [vmem:[%s306 + $0x240] sm:$0xff]
                %357 = vst [vmem:[%s307 + $0x120] sm:$0xff] %v356
                %v358 = vld [vmem:[%s306 + $0x258] sm:$0xff]
                %359 = vst [vmem:[%s307 + $0x12c] sm:$0xff] %v358
                %v360 = vld [vmem:[%s306 + $0x270] sm:$0xff]
                %361 = vst [vmem:[%s307 + $0x138] sm:$0xff] %v360
                %v362 = vld [vmem:[%s306 + $0x288] sm:$0xff]
                %363 = vst [vmem:[%s307 + $0x144] sm:$0xff] %v362
                %v364 = vld [vmem:[%s306 + $0x2a0] sm:$0xff]
                %365 = vst [vmem:[%s307 + $0x150] sm:$0xff] %v364
                %v366 = vld [vmem:[%s306 + $0x2b8] sm:$0xff]
                %367 = vst [vmem:[%s307 + $0x15c] sm:$0xff] %v366
                %v368 = vld [vmem:[%s306 + $0x2d0] sm:$0xff]
                %369 = vst [vmem:[%s307 + $0x168] sm:$0xff] %v368
                %v370 = vld [vmem:[%s306 + $0x2e8] sm:$0xff]
                %371 = vst [vmem:[%s307 + $0x174] sm:$0xff] %v370
              $region53: #{attention_forward.1} parent=47 // loop_footer
                %s305 = sadd.s32 1, %s301
              $region54: #{attention_forward.1} parent=47 // loop_footer_branch
                %300 = sbr.rel target = $region50
              $region55: #{attention_forward.1} parent=47 // loop_exit
                _
              loop: start=0, step=1, limit=1
              $region56: #{attention_forward.1} parent=47 // loop_pre_header
                _
              $region57: #{attention_forward.1} parent=47 // loop_header
                %s374 = sphi 0, %s378
                %p375 = scmp.ge.s32.totalorder %s374, 1
                %s379 = sphi %s298, %s298
                %s380 = sphi %s299, %s299
              $region58: #{attention_forward.1} parent=47 // loop_header_branch
                %377 = sbr.rel (%p375) target = $region62
              $region59: #{attention_forward.1} parent=47 // loop_body
                %v381 = vld [vmem:[%s379] sm:$0xf]
                %382 = vst [vmem:[%s380] sm:$0xf] %v381
                %v383 = vld [vmem:[%s379 + $0x18] sm:$0xf]
                %384 = vst [vmem:[%s380 + $0xc] sm:$0xf] %v383
                %v385 = vld [vmem:[%s379 + $0x30] sm:$0xf]
                %386 = vst [vmem:[%s380 + $0x18] sm:$0xf] %v385
                %v387 = vld [vmem:[%s379 + $0x48] sm:$0xf]
                %388 = vst [vmem:[%s380 + $0x24] sm:$0xf] %v387
                %v389 = vld [vmem:[%s379 + $0x60] sm:$0xf]
                %390 = vst [vmem:[%s380 + $0x30] sm:$0xf] %v389
                %v391 = vld [vmem:[%s379 + $0x78] sm:$0xf]
                %392 = vst [vmem:[%s380 + $0x3c] sm:$0xf] %v391
                %v393 = vld [vmem:[%s379 + $0x90] sm:$0xf]
                %394 = vst [vmem:[%s380 + $0x48] sm:$0xf] %v393
                %v395 = vld [vmem:[%s379 + $0xa8] sm:$0xf]
                %396 = vst [vmem:[%s380 + $0x54] sm:$0xf] %v395
                %v397 = vld [vmem:[%s379 + $0xc0] sm:$0xf]
                %398 = vst [vmem:[%s380 + $0x60] sm:$0xf] %v397
                %v399 = vld [vmem:[%s379 + $0xd8] sm:$0xf]
                %400 = vst [vmem:[%s380 + $0x6c] sm:$0xf] %v399
                %v401 = vld [vmem:[%s379 + $0xf0] sm:$0xf]
                %402 = vst [vmem:[%s380 + $0x78] sm:$0xf] %v401
                %v403 = vld [vmem:[%s379 + $0x108] sm:$0xf]
                %404 = vst [vmem:[%s380 + $0x84] sm:$0xf] %v403
                %v405 = vld [vmem:[%s379 + $0x120] sm:$0xf]
                %406 = vst [vmem:[%s380 + $0x90] sm:$0xf] %v405
                %v407 = vld [vmem:[%s379 + $0x138] sm:$0xf]
                %408 = vst [vmem:[%s380 + $0x9c] sm:$0xf] %v407
                %v409 = vld [vmem:[%s379 + $0x150] sm:$0xf]
                %410 = vst [vmem:[%s380 + $0xa8] sm:$0xf] %v409
                %v411 = vld [vmem:[%s379 + $0x168] sm:$0xf]
                %412 = vst [vmem:[%s380 + $0xb4] sm:$0xf] %v411
                %v413 = vld [vmem:[%s379 + $0x180] sm:$0xf]
                %414 = vst [vmem:[%s380 + $0xc0] sm:$0xf] %v413
                %v415 = vld [vmem:[%s379 + $0x198] sm:$0xf]
                %416 = vst [vmem:[%s380 + $0xcc] sm:$0xf] %v415
                %v417 = vld [vmem:[%s379 + $0x1b0] sm:$0xf]
                %418 = vst [vmem:[%s380 + $0xd8] sm:$0xf] %v417
                %v419 = vld [vmem:[%s379 + $0x1c8] sm:$0xf]
                %420 = vst [vmem:[%s380 + $0xe4] sm:$0xf] %v419
                %v421 = vld [vmem:[%s379 + $0x1e0] sm:$0xf]
                %422 = vst [vmem:[%s380 + $0xf0] sm:$0xf] %v421
                %v423 = vld [vmem:[%s379 + $0x1f8] sm:$0xf]
                %424 = vst [vmem:[%s380 + $0xfc] sm:$0xf] %v423
                %v425 = vld [vmem:[%s379 + $0x210] sm:$0xf]
                %426 = vst [vmem:[%s380 + $0x108] sm:$0xf] %v425
                %v427 = vld [vmem:[%s379 + $0x228] sm:$0xf]
                %428 = vst [vmem:[%s380 + $0x114] sm:$0xf] %v427
                %v429 = vld [vmem:[%s379 + $0x240] sm:$0xf]
                %430 = vst [vmem:[%s380 + $0x120] sm:$0xf] %v429
                %v431 = vld [vmem:[%s379 + $0x258] sm:$0xf]
                %432 = vst [vmem:[%s380 + $0x12c] sm:$0xf] %v431
                %v433 = vld [vmem:[%s379 + $0x270] sm:$0xf]
                %434 = vst [vmem:[%s380 + $0x138] sm:$0xf] %v433
                %v435 = vld [vmem:[%s379 + $0x288] sm:$0xf]
                %436 = vst [vmem:[%s380 + $0x144] sm:$0xf] %v435
                %v437 = vld [vmem:[%s379 + $0x2a0] sm:$0xf]
                %438 = vst [vmem:[%s380 + $0x150] sm:$0xf] %v437
                %v439 = vld [vmem:[%s379 + $0x2b8] sm:$0xf]
                %440 = vst [vmem:[%s380 + $0x15c] sm:$0xf] %v439
                %v441 = vld [vmem:[%s379 + $0x2d0] sm:$0xf]
                %442 = vst [vmem:[%s380 + $0x168] sm:$0xf] %v441
                %v443 = vld [vmem:[%s379 + $0x2e8] sm:$0xf]
                %444 = vst [vmem:[%s380 + $0x174] sm:$0xf] %v443
              $region60: #{attention_forward.1} parent=47 // loop_footer
                %s378 = sadd.s32 1, %s374
              $region61: #{attention_forward.1} parent=47 // loop_footer_branch
                %373 = sbr.rel target = $region57
              $region62: #{attention_forward.1} parent=47 // loop_exit
                _
            $region48: #{attention_forward.1} parent=43 // pred_fallthru
              _
          $region44: #{attention_forward.1} parent=39 // pred_fallthru
            _
          %445 = vnop
        $region40: #{attention_forward.1} parent=31 // pred_fallthru
          _
        // Predicated region
        $region63: #{attention_forward.1} parent=31 // pred_check
          %p446 = pneg %p101
        $region64: #{attention_forward.1} parent=31 // pred_check_branch
          %448 = sbr.rel (%p446) target = $region66
        $region65: #{attention_forward.1} parent=31 // pred_region
          %s449 = smul.u32 3, %s25
          %p450 = scmp.lt.s32.totalorder %s449, 5
          %s451 = scalar_select %p450, %s449, 5
          %s452 = scalar_lea.vmem %s2, %s451
          %s453 = smul.u32 3, %s25
        $region66: #{attention_forward.1} parent=31 // pred_fallthru
          _
        // Predicated region
        $region67: #{attention_forward.1} parent=31 // pred_check
          %p454 = pneg %p211
        $region68: #{attention_forward.1} parent=31 // pred_check_branch
          %456 = sbr.rel (%p454) target = $region70
        $region69: #{attention_forward.1} parent=31 // pred_region
          %p457 = scmp.lt.s32.totalorder %s24, 1
          %s458 = scalar_select %p457, %s24, 1
          %s459 = smul.addr %s458, 2
          %s460 = smul.addr %s459, 2
          %s461 = scalar_lea.vmem %s7, %s460
        $region70: #{attention_forward.1} parent=31 // pred_fallthru
          _
      $region32: #{attention_forward.1} parent=5 // pred_fallthru
        _
      %p462 = scmp.le.s32.totalorder 1, %s17
      %p463 = scmp.lt.s32.totalorder %s17, 5
      %p464 = pnand %p462, %p463
      %p465 = pneg %p464
      // Predicated region
      $region71: #{attention_forward.1} parent=5 // pred_check
        _
      $region72: #{attention_forward.1} parent=5 // pred_check_branch
        %467 = sbr.rel (%p464) target = $region74
      $region73: #{attention_forward.1} parent=5 // pred_region
        %s468 = ssub.s32 %s17, 1
        %s469 = sand.u32 %s68, 1
        %s470 = sand.u32 %s68, 1
        %s471 = smul.addr %s470, 384
        %s472 = scalar_lea.vmem [#allocation2], %s471
        // Predicated region
        $region75: #{attention_forward.1} parent=73 // pred_check
          %p473 = pneg %p81
        $region76: #{attention_forward.1} parent=73 // pred_check_branch
          %475 = sbr.rel (%p473) target = $region78
        $region77: #{attention_forward.1} parent=73 // pred_region
          _
        $region78: #{attention_forward.1} parent=73 // pred_fallthru
          _
        %p476 = scmp.lt.s32.totalorder %s26, 1
        %s477 = scalar_select %p476, %s26, 1
        %s478 = smul.addr %s477, 4
        %s479 = smul.addr %s478, 4
        %s480 = scalar_lea.vmem %s0, %s479
        %p481 = pneg %p55
        %p482 = pneg %p52
        %s483 = sand.u32 %s68, 1
        %s484 = sand.u32 %s68, 1
        %s485 = smul.addr %s484, 384
        %s486 = scalar_lea.vmem [#allocation2], %s485
        %p487 = pneg %p81
        %p488 = pneg %p78
        %s489 = smul.u32 3, %s27
        %p490 = scmp.lt.s32.totalorder %s489, 5
        %s491 = scalar_select %p490, %s489, 5
        %s492 = scalar_lea.vmem %s2, %s491
        %p493 = pneg %p107
        %p494 = pneg %p104
        %p495 = pneg %p128
        %p496 = pneg %p125
        %p497 = pneg %p149
        %p498 = pneg %p146
        %p499 = pneg %p170
        %p500 = pneg %p167
        %p501 = pneg %p191
        %p502 = pneg %p188
        %p503 = scmp.lt.s32.totalorder %s26, 1
        %s504 = scalar_select %p503, %s26, 1
        %s505 = smul.addr %s504, 2
        %s506 = smul.addr %s505, 2
        %s507 = scalar_lea.vmem %s7, %s506
        %p508 = pneg %p217
        %p509 = pneg %p214
        %p510 = pneg %p245
        %p511 = pneg %p242
        %s512 = sand.u32 %s232, 1
        %s513 = scalar_lea.sflag [#allocation4], %s512
        %s514 = sand.u32 %s232, 1
        %s515 = smul.addr %s514, 16
        %s516 = scalar_lea.vmem [#allocation3], %s515
        %p517 = scmp.lt.s32.totalorder %s26, 1
        %s518 = scalar_select %p517, %s26, 1
        %s519 = smul.addr %s518, 4
        %s520 = smul.addr %s519, 4
        %s521 = scalar_lea.vmem %s0, %s520
        %s522 = smul.u32 3, %s27
        %s523 = smul.u32 3, %s27
        %p524 = scmp.lt.s32.totalorder %s523, 5
        %s525 = scalar_select %p524, %s523, 5
        %s526 = scalar_lea.vmem %s2, %s525
        %s527 = smul.u32 3, %s27
        %p528 = scmp.lt.s32.totalorder %s26, 1
        %s529 = scalar_select %p528, %s26, 1
        %s530 = smul.addr %s529, 2
        %s531 = smul.addr %s530, 2
        %s532 = scalar_lea.vmem %s7, %s531
        %v534 = vld [vmem:[%s521] sm:$0xff]
        %v535 = vld [vmem:[%s521 + $0x8] sm:$0xff]
        %v536 = vld [vmem:[%s472] sm:$0xff]
        %v537 = vld [vmem:[%s472 + $0x8] sm:$0xf]
        %v538 = vld [vmem:[%s472 + $0xc] sm:$0xff]
        %v539 = vld [vmem:[%s472 + $0x14] sm:$0xf]
        %v540 = vld [vmem:[%s472 + $0x18] sm:$0xff]
        %v541 = vld [vmem:[%s472 + $0x20] sm:$0xf]
        %v542 = vld [vmem:[%s472 + $0x24] sm:$0xff]
        %v543 = vld [vmem:[%s472 + $0x2c] sm:$0xf]
        %v544 = vld [vmem:[%s472 + $0x30] sm:$0xff]
        %v545 = vld [vmem:[%s472 + $0x38] sm:$0xf]
        %v546 = vld [vmem:[%s472 + $0x3c] sm:$0xff]
        %v547 = vld [vmem:[%s472 + $0x44] sm:$0xf]
        %v548 = vld [vmem:[%s472 + $0x48] sm:$0xff]
        %v549 = vld [vmem:[%s472 + $0x50] sm:$0xf]
        %v550 = vld [vmem:[%s472 + $0x54] sm:$0xff]
        %v551 = vld [vmem:[%s472 + $0x5c] sm:$0xf]
        %v552 = vld [vmem:[%s472 + $0x60] sm:$0xff]
        %v553 = vld [vmem:[%s472 + $0x68] sm:$0xf]
        %v554 = vld [vmem:[%s472 + $0x6c] sm:$0xff]
        %v555 = vld [vmem:[%s472 + $0x74] sm:$0xf]
        %v556 = vld [vmem:[%s472 + $0x78] sm:$0xff]
        %v557 = vld [vmem:[%s472 + $0x80] sm:$0xf]
        %v558 = vld [vmem:[%s472 + $0x84] sm:$0xff]
        %v559 = vld [vmem:[%s472 + $0x8c] sm:$0xf]
        %v560 = vld [vmem:[%s472 + $0x90] sm:$0xff]
        %v561 = vld [vmem:[%s472 + $0x98] sm:$0xf]
        %v562 = vld [vmem:[%s472 + $0x9c] sm:$0xff]
        %v563 = vld [vmem:[%s472 + $0xa4] sm:$0xf]
        %v564 = vld [vmem:[%s472 + $0xa8] sm:$0xff]
        %v565 = vld [vmem:[%s472 + $0xb0] sm:$0xf]
        %v566 = vld [vmem:[%s472 + $0xb4] sm:$0xff]
        %v567 = vld [vmem:[%s472 + $0xbc] sm:$0xf]
        %v568 = vld [vmem:[%s472 + $0xc0] sm:$0xff]
        %v569 = vld [vmem:[%s472 + $0xc8] sm:$0xf]
        %v570 = vld [vmem:[%s472 + $0xcc] sm:$0xff]
        %v571 = vld [vmem:[%s472 + $0xd4] sm:$0xf]
        %v572 = vld [vmem:[%s472 + $0xd8] sm:$0xff]
        %v573 = vld [vmem:[%s472 + $0xe0] sm:$0xf]
        %v574 = vld [vmem:[%s472 + $0xe4] sm:$0xff]
        %v575 = vld [vmem:[%s472 + $0xec] sm:$0xf]
        %v576 = vld [vmem:[%s472 + $0xf0] sm:$0xff]
        %v577 = vld [vmem:[%s472 + $0xf8] sm:$0xf]
        %v578 = vld [vmem:[%s472 + $0xfc] sm:$0xff]
        %v579 = vld [vmem:[%s472 + $0x104] sm:$0xf]
        %v580 = vld [vmem:[%s472 + $0x108] sm:$0xff]
        %v581 = vld [vmem:[%s472 + $0x110] sm:$0xf]
        %v582 = vld [vmem:[%s472 + $0x114] sm:$0xff]
        %v583 = vld [vmem:[%s472 + $0x11c] sm:$0xf]
        %v584 = vld [vmem:[%s472 + $0x120] sm:$0xff]
        %v585 = vld [vmem:[%s472 + $0x128] sm:$0xf]
        %v586 = vld [vmem:[%s472 + $0x12c] sm:$0xff]
        %v587 = vld [vmem:[%s472 + $0x134] sm:$0xf]
        %v588 = vld [vmem:[%s472 + $0x138] sm:$0xff]
        %v589 = vld [vmem:[%s472 + $0x140] sm:$0xf]
        %v590 = vld [vmem:[%s472 + $0x144] sm:$0xff]
        %v591 = vld [vmem:[%s472 + $0x14c] sm:$0xf]
        %v592 = vld [vmem:[%s472 + $0x150] sm:$0xff]
        %v593 = vld [vmem:[%s472 + $0x158] sm:$0xf]
        %v594 = vld [vmem:[%s472 + $0x15c] sm:$0xff]
        %v595 = vld [vmem:[%s472 + $0x164] sm:$0xf]
        %v596 = vld [vmem:[%s472 + $0x168] sm:$0xff]
        %v597 = vld [vmem:[%s472 + $0x170] sm:$0xf]
        %v598 = vld [vmem:[%s472 + $0x174] sm:$0xff]
        %v599 = vld [vmem:[%s472 + $0x17c] sm:$0xf]
        %v600 = vld [vmem:[%s526] sm:$0x7]
        %v602 = vlaneseq
        %v603 = vshrl.u32 %v602, 7
        %v604 = vsub.s32 0, %v603
        %v605 = vrot.slane %v600, %v604
        %v606 = vlaneseq
        %v607 = vshrl.u32 %v606, 7
        %v608 = vsub.s32 1, %v607
        %v609 = vrot.slane %v600, %v608
        %v610 = vlaneseq
        %v611 = vshrl.u32 %v610, 7
        %v612 = vsub.s32 2, %v611
        %v613 = vrot.slane %v600, %v612
        %v619 = vunpack.c.l.b16 %v534
        %v620 = vunpack.c.h.b16 %v534
        %v621 = vunpack.c.l.b16 %v535
        %v622 = vunpack.c.h.b16 %v535
        %v623 = vpack.c.b16 %v621, %v619
        %v624 = vpack.c.b16 %v622, %v620
        %v691 = vunpack.c.l.b16 %v536
        %v692 = vunpack.c.h.b16 %v536
        %v693 = vunpack.c.l.b16 %v537
        %v694 = vunpack.c.l.b16 %v538
        %v695 = vunpack.c.h.b16 %v538
        %v696 = vunpack.c.l.b16 %v539
        %v697 = vunpack.c.l.b16 %v540
        %v698 = vunpack.c.h.b16 %v540
        %v699 = vunpack.c.l.b16 %v541
        %v700 = vunpack.c.l.b16 %v542
        %v701 = vunpack.c.h.b16 %v542
        %v702 = vunpack.c.l.b16 %v543
        %v703 = vunpack.c.l.b16 %v544
        %v704 = vunpack.c.h.b16 %v544
        %v705 = vunpack.c.l.b16 %v545
        %v706 = vunpack.c.l.b16 %v546
        %v707 = vunpack.c.h.b16 %v546
        %v708 = vunpack.c.l.b16 %v547
        %v709 = vunpack.c.l.b16 %v548
        %v710 = vunpack.c.h.b16 %v548
        %v711 = vunpack.c.l.b16 %v549
        %v712 = vunpack.c.l.b16 %v550
        %v713 = vunpack.c.h.b16 %v550
        %v714 = vunpack.c.l.b16 %v551
        %v715 = vunpack.c.l.b16 %v552
        %v716 = vunpack.c.h.b16 %v552
        %v717 = vunpack.c.l.b16 %v553
        %v718 = vunpack.c.l.b16 %v554
        %v719 = vunpack.c.h.b16 %v554
        %v720 = vunpack.c.l.b16 %v555
        %v721 = vunpack.c.l.b16 %v556
        %v722 = vunpack.c.h.b16 %v556
        %v723 = vunpack.c.l.b16 %v557
        %v724 = vunpack.c.l.b16 %v558
        %v725 = vunpack.c.h.b16 %v558
        %v726 = vunpack.c.l.b16 %v559
        %v727 = vunpack.c.l.b16 %v560
        %v728 = vunpack.c.h.b16 %v560
        %v729 = vunpack.c.l.b16 %v561
        %v730 = vunpack.c.l.b16 %v562
        %v731 = vunpack.c.h.b16 %v562
        %v732 = vunpack.c.l.b16 %v563
        %v733 = vunpack.c.l.b16 %v564
        %v734 = vunpack.c.h.b16 %v564
        %v735 = vunpack.c.l.b16 %v565
        %v736 = vunpack.c.l.b16 %v566
        %v737 = vunpack.c.h.b16 %v566
        %v738 = vunpack.c.l.b16 %v567
        %v739 = vunpack.c.l.b16 %v568
        %v740 = vunpack.c.h.b16 %v568
        %v741 = vunpack.c.l.b16 %v569
        %v742 = vunpack.c.l.b16 %v570
        %v743 = vunpack.c.h.b16 %v570
        %v744 = vunpack.c.l.b16 %v571
        %v745 = vunpack.c.l.b16 %v572
        %v746 = vunpack.c.h.b16 %v572
        %v747 = vunpack.c.l.b16 %v573
        %v748 = vunpack.c.l.b16 %v574
        %v749 = vunpack.c.h.b16 %v574
        %v750 = vunpack.c.l.b16 %v575
        %v751 = vunpack.c.l.b16 %v576
        %v752 = vunpack.c.h.b16 %v576
        %v753 = vunpack.c.l.b16 %v577
        %v754 = vunpack.c.l.b16 %v578
        %v755 = vunpack.c.h.b16 %v578
        %v756 = vunpack.c.l.b16 %v579
        %v757 = vunpack.c.l.b16 %v580
        %v758 = vunpack.c.h.b16 %v580
        %v759 = vunpack.c.l.b16 %v581
        %v760 = vunpack.c.l.b16 %v582
        %v761 = vunpack.c.h.b16 %v582
        %v762 = vunpack.c.l.b16 %v583
        %v763 = vunpack.c.l.b16 %v584
        %v764 = vunpack.c.h.b16 %v584
        %v765 = vunpack.c.l.b16 %v585
        %v766 = vunpack.c.l.b16 %v586
        %v767 = vunpack.c.h.b16 %v586
        %v768 = vunpack.c.l.b16 %v587
        %v769 = vunpack.c.l.b16 %v588
        %v770 = vunpack.c.h.b16 %v588
        %v771 = vunpack.c.l.b16 %v589
        %v772 = vunpack.c.l.b16 %v590
        %v773 = vunpack.c.h.b16 %v590
        %v774 = vunpack.c.l.b16 %v591
        %v775 = vunpack.c.l.b16 %v592
        %v776 = vunpack.c.h.b16 %v592
        %v777 = vunpack.c.l.b16 %v593
        %v778 = vunpack.c.l.b16 %v594
        %v779 = vunpack.c.h.b16 %v594
        %v780 = vunpack.c.l.b16 %v595
        %v781 = vunpack.c.l.b16 %v596
        %v782 = vunpack.c.h.b16 %v596
        %v783 = vunpack.c.l.b16 %v597
        %v784 = vunpack.c.l.b16 %v598
        %v785 = vunpack.c.h.b16 %v598
        %v786 = vunpack.c.l.b16 %v599
        %v787 = vpack.c.b16 %v694, %v691
        %v788 = vpack.c.b16 %v695, %v692
        %v789 = vpack.c.b16 %v696, %v693
        %v790 = vpack.c.b16 %v700, %v697
        %v791 = vpack.c.b16 %v701, %v698
        %v792 = vpack.c.b16 %v702, %v699
        %v793 = vpack.c.b16 %v706, %v703
        %v794 = vpack.c.b16 %v707, %v704
        %v795 = vpack.c.b16 %v708, %v705
        %v796 = vpack.c.b16 %v712, %v709
        %v797 = vpack.c.b16 %v713, %v710
        %v798 = vpack.c.b16 %v714, %v711
        %v799 = vpack.c.b16 %v718, %v715
        %v800 = vpack.c.b16 %v719, %v716
        %v801 = vpack.c.b16 %v720, %v717
        %v802 = vpack.c.b16 %v724, %v721
        %v803 = vpack.c.b16 %v725, %v722
        %v804 = vpack.c.b16 %v726, %v723
        %v805 = vpack.c.b16 %v730, %v727
        %v806 = vpack.c.b16 %v731, %v728
        %v807 = vpack.c.b16 %v732, %v729
        %v808 = vpack.c.b16 %v736, %v733
        %v809 = vpack.c.b16 %v737, %v734
        %v810 = vpack.c.b16 %v738, %v735
        %v811 = vpack.c.b16 %v742, %v739
        %v812 = vpack.c.b16 %v743, %v740
        %v813 = vpack.c.b16 %v744, %v741
        %v814 = vpack.c.b16 %v748, %v745
        %v815 = vpack.c.b16 %v749, %v746
        %v816 = vpack.c.b16 %v750, %v747
        %v817 = vpack.c.b16 %v754, %v751
        %v818 = vpack.c.b16 %v755, %v752
        %v819 = vpack.c.b16 %v756, %v753
        %v820 = vpack.c.b16 %v760, %v757
        %v821 = vpack.c.b16 %v761, %v758
        %v822 = vpack.c.b16 %v762, %v759
        %v823 = vpack.c.b16 %v766, %v763
        %v824 = vpack.c.b16 %v767, %v764
        %v825 = vpack.c.b16 %v768, %v765
        %v826 = vpack.c.b16 %v772, %v769
        %v827 = vpack.c.b16 %v773, %v770
        %v828 = vpack.c.b16 %v774, %v771
        %v829 = vpack.c.b16 %v778, %v775
        %v830 = vpack.c.b16 %v779, %v776
        %v831 = vpack.c.b16 %v780, %v777
        %v832 = vpack.c.b16 %v784, %v781
        %v833 = vpack.c.b16 %v785, %v782
        %v834 = vpack.c.b16 %v786, %v783
        %883 = vmatprep.subr.bf16.mxu0 %v788
        %884 = vmatpush1.bf16.msra.mxu0 %v787
        %885 = vmatprep.subr.bf16.mxu0 %v791
        %886 = vmatpush1.bf16.msra.mxu0 %v790
        %887 = vmatprep.subr.bf16.mxu0 %v794
        %888 = vmatpush1.bf16.msra.mxu0 %v793
        %889 = vmatprep.subr.bf16.mxu0 %v797
        %890 = vmatpush1.bf16.msra.mxu0 %v796
        %891 = vmatprep.subr.bf16.mxu0 %v800
        %892 = vmatpush1.bf16.msra.mxu0 %v799
        %893 = vmatprep.subr.bf16.mxu0 %v803
        %894 = vmatpush1.bf16.msra.mxu0 %v802
        %895 = vmatprep.subr.bf16.mxu0 %v806
        %896 = vmatpush1.bf16.msra.mxu0 %v805
        %897 = vmatprep.subr.bf16.mxu0 %v809
        %898 = vmatpush1.bf16.msra.mxu0 %v808
        %899 = vmatprep.subr.bf16.mxu0 %v812
        %900 = vmatpush1.bf16.msra.mxu0 %v811
        %901 = vmatprep.subr.bf16.mxu0 %v815
        %902 = vmatpush1.bf16.msra.mxu0 %v814
        %903 = vmatprep.subr.bf16.mxu0 %v818
        %904 = vmatpush1.bf16.msra.mxu0 %v817
        %905 = vmatprep.subr.bf16.mxu0 %v821
        %906 = vmatpush1.bf16.msra.mxu0 %v820
        %907 = vmatprep.subr.bf16.mxu0 %v824
        %908 = vmatpush1.bf16.msra.mxu0 %v823
        %909 = vmatprep.subr.bf16.mxu0 %v827
        %910 = vmatpush1.bf16.msra.mxu0 %v826
        %911 = vmatprep.subr.bf16.mxu0 %v830
        %912 = vmatpush1.bf16.msra.mxu0 %v829
        %913 = vmatprep.subr.bf16.mxu0 %v833
        %914 = vmatpush1.bf16.msra.mxu0 %v832
        %915 = vmatprep.mubr.bf16.mxu0 %v624
        %916 = vmatmul.mubr.bf16.gmra.mrb[0].mxu0 %v623
        %v917 = vpop.f32.mrb[0].mxu0
        %v918 = vadd.f32 %v605, %v917
        %v919 = vpop.f32.mrb[0].mxu0
        %v920 = vadd.f32 %v609, %v919
        %v921 = vpop.f32.mrb[0].mxu0
        %v922 = vadd.f32 %v605, %v921
        %v923 = vpop.f32.mrb[0].mxu0
        %v924 = vadd.f32 %v609, %v923
        %925 = vdwg.mxu0
        %926 = vmatprep.subr.bf16.mxu0 0
        %927 = vmatpush1.bf16.msra.mxu0 %v789
        %928 = vmatprep.subr.bf16.mxu0 0
        %929 = vmatpush1.bf16.msra.mxu0 %v792
        %930 = vmatprep.subr.bf16.mxu0 0
        %931 = vmatpush1.bf16.msra.mxu0 %v795
        %932 = vmatprep.subr.bf16.mxu0 0
        %933 = vmatpush1.bf16.msra.mxu0 %v798
        %934 = vmatprep.subr.bf16.mxu0 0
        %935 = vmatpush1.bf16.msra.mxu0 %v801
        %936 = vmatprep.subr.bf16.mxu0 0
        %937 = vmatpush1.bf16.msra.mxu0 %v804
        %938 = vmatprep.subr.bf16.mxu0 0
        %939 = vmatpush1.bf16.msra.mxu0 %v807
        %940 = vmatprep.subr.bf16.mxu0 0
        %941 = vmatpush1.bf16.msra.mxu0 %v810
        %942 = vmatprep.subr.bf16.mxu0 0
        %943 = vmatpush1.bf16.msra.mxu0 %v813
        %944 = vmatprep.subr.bf16.mxu0 0
        %945 = vmatpush1.bf16.msra.mxu0 %v816
        %946 = vmatprep.subr.bf16.mxu0 0
        %947 = vmatpush1.bf16.msra.mxu0 %v819
        %948 = vmatprep.subr.bf16.mxu0 0
        %949 = vmatpush1.bf16.msra.mxu0 %v822
        %950 = vmatprep.subr.bf16.mxu0 0
        %951 = vmatpush1.bf16.msra.mxu0 %v825
        %952 = vmatprep.subr.bf16.mxu0 0
        %953 = vmatpush1.bf16.msra.mxu0 %v828
        %954 = vmatprep.subr.bf16.mxu0 0
        %955 = vmatpush1.bf16.msra.mxu0 %v831
        %956 = vmatprep.subr.bf16.mxu0 0
        %957 = vmatpush1.bf16.msra.mxu0 %v834
        %958 = vmatprep.mubr.bf16.mxu0 %v624
        %959 = vmatmul.mubr.bf16.gmra.mrb[0].mxu0 %v623
        %v960 = vpop.f32.mrb[0].mxu0
        %v961 = vadd.f32 %v613, %v960
        %v962 = vpop.f32.mrb[0].mxu0
        %v963 = vpop.f32.mrb[0].mxu0
        %v964 = vadd.f32 %v613, %v963
        %v965 = vpop.f32.mrb[0].mxu0
        %966 = vdwg.mxu0
        %v967 = vlaneseq
        %v968 = vand.u32 %v967, 127
        %v969 = vand.u32 %v968, 1
        %vm970 = vcmp.eq.s32.totalorder %v969, 0
        %971 = vrot.lane.b32.xlu0 %v918, 127
        %v972 = vpop.permute.xlu0 %971
        %973 = vrot.lane.b32.xlu0 %v922, 127
        %v974 = vpop.permute.xlu0 %973
        %975 = vrot.lane.b32.xlu0 %v918, 1
        %v976 = vpop.permute.xlu0 %975
        %977 = vrot.lane.b32.xlu0 %v922, 1
        %v978 = vpop.permute.xlu0 %977
        %v979 = vsel %vm970, %v972, %v976
        %v980 = vsel %vm970, %v974, %v978
        %981 = vrot.lane.b32.xlu0 %v920, 127
        %v982 = vpop.permute.xlu0 %981
        %983 = vrot.lane.b32.xlu0 %v924, 127
        %v984 = vpop.permute.xlu0 %983
        %985 = vrot.lane.b32.xlu0 %v920, 1
        %v986 = vpop.permute.xlu0 %985
        %987 = vrot.lane.b32.xlu0 %v924, 1
        %v988 = vpop.permute.xlu0 %987
        %v989 = vsel %vm970, %v982, %v986
        %v990 = vsel %vm970, %v984, %v988
        %v991 = vld [vmem:[%s3] sm:$0xff]
        %v992 = vld [vmem:[%s3 + $0x8] sm:$0xff]
        %v993 = vmul.f32 %v918, %v991
        %v994 = vmul.f32 %v922, %v992
        %v995 = vld [vmem:[%s4] sm:$0xff]
        %v996 = vld [vmem:[%s4 + $0x8] sm:$0xff]
        %v997 = vmul.f32 %v979, %v995
        %v998 = vmul.f32 %v980, %v996
        %v999 = vadd.f32 %v993, %v997
        %v1000 = vadd.f32 %v994, %v998
        %v1001 = vld [vmem:[%s5] sm:$0xff]
        %v1002 = vld [vmem:[%s5 + $0x8] sm:$0xff]
        %v1003 = vmul.f32 %v920, %v1001
        %v1004 = vmul.f32 %v924, %v1002
        %v1005 = vld [vmem:[%s6] sm:$0xff]
        %v1006 = vld [vmem:[%s6 + $0x8] sm:$0xff]
        %v1007 = vmul.f32 %v989, %v1005
        %v1008 = vmul.f32 %v990, %v1006
        %v1009 = vadd.f32 %v1003, %v1007
        %v1010 = vadd.f32 %v1004, %v1008
        %v1011 = vpack.c.bf16 %v1000, %v999
        %v1012 = vpack.c.bf16 %v1010, %v1009
        %1013 = vmatprep.subr.bf16.mxu0 0
        %1014 = vmatpush1.bf16.xpose.msra.mxu0 %v1012
        %1015 = vmatprep.subr.bf16.mxu0 0
        %1016 = vmatpush1.bf16.xpose.msra.mxu0 0
        %1017 = vmatprep.subr.bf16.mxu0 0
        %1018 = vmatpush1.bf16.xpose.msra.mxu0 0
        %1019 = vmatprep.subr.bf16.mxu0 0
        %1020 = vmatpush1.bf16.xpose.msra.mxu0 0
        %1021 = vmatprep.subr.bf16.mxu0 0
        %1022 = vmatpush1.bf16.xpose.msra.mxu0 0
        %1023 = vmatprep.subr.bf16.mxu0 0
        %1024 = vmatpush1.bf16.xpose.msra.mxu0 0
        %1025 = vmatprep.subr.bf16.mxu0 0
        %1026 = vmatpush1.bf16.xpose.msra.mxu0 0
        %1027 = vmatprep.subr.bf16.mxu0 0
        %1028 = vmatpush1.bf16.xpose.msra.mxu0 0
        %1029 = vmatprep.subr.bf16.mxu0 0
        %1030 = vmatpush1.bf16.xpose.msra.mxu0 0
        %1031 = vmatprep.subr.bf16.mxu0 0
        %1032 = vmatpush1.bf16.xpose.msra.mxu0 0
        %1033 = vmatprep.subr.bf16.mxu0 0
        %1034 = vmatpush1.bf16.xpose.msra.mxu0 0
        %1035 = vmatprep.subr.bf16.mxu0 0
        %1036 = vmatpush1.bf16.xpose.msra.mxu0 0
        %1037 = vmatprep.subr.bf16.mxu0 0
        %1038 = vmatpush1.bf16.xpose.msra.mxu0 0
        %1039 = vmatprep.subr.bf16.mxu0 0
        %1040 = vmatpush1.bf16.xpose.msra.mxu0 0
        %1041 = vmatprep.subr.bf16.mxu0 0
        %1042 = vmatpush1.bf16.xpose.msra.mxu0 0
        %1043 = vmatprep.subr.bf16.mxu0 0
        %1044 = vmatpush1.bf16.xpose.msra.mxu0 0
        %1045 = vmatprep.mubr.bf16.mxu0 0
        %1046 = vmatmul.mubr.bf16.gmra.mrb[0].mxu0 %v1011
        %v1047 = vpop.f32.mrb[0].mxu0
        %v1048 = vadd.f32 0.0, %v1047
        %v1049 = vpop.f32.mrb[0].mxu0
        %v1050 = vpop.f32.mrb[0].mxu0
        %v1051 = vadd.f32 0.0, %v1050
        %v1052 = vpop.f32.mrb[0].mxu0
        %1053 = vdwg.mxu0
        %v1054 = vld [vmem:[%s532] sm:$0x3]
        %v1055 = vld [vmem:[%s532 + $0x2] sm:$0x3]
        %v1056 = vunpack.c.0.s8 %v1054
        %v1057 = vunpack.c.0.s8 %v1055
        %v1058 = vcvt.s32.f32 %v1056
        %v1059 = vcvt.s32.f32 %v1057
        %vm1060 = vcmp.ne.f32.partialorder %v1058, 0.0
        %vm1061 = vcmp.ne.f32.partialorder %v1059, 0.0
        %v1062 = vsel %vm1060, %v1048, -1e+30
        %v1063 = vsel %vm1061, %v1051, -1e+30
        %vm1064 = vcmask 130048
        %v1065 = vsel %vm1064, %v1062, -inf
        %1066 = vmax.xlane.f32.xlu0 %v1065
        %v1067 = vpop.xlane.xlu0 %1066
        %v1068 = vsel %vm1064, %v1063, -inf
        %1069 = vmax.xlane.f32.xlu0 %v1068
        %v1070 = vpop.xlane.xlu0 %1069
        %v1071 = vsub.f32 %v1062, %v1067
        %v1072 = vsub.f32 %v1063, %v1070
        %v1073 = vmul.f32 %v1071, 1.442695
        %v1074 = vpow.pop %v1073
        %v1075 = vmul.f32 %v1072, 1.442695
        %v1076 = vpow.pop %v1075
        %v1077 = vsel %vm1064, %v1074, 0.0
        %1078 = vadd.xlane.f32.xlu0 %v1077
        %v1079 = vpop.xlane.xlu0 %1078
        %v1080 = vsel %vm1064, %v1076, 0.0
        %1081 = vadd.xlane.f32.xlu0 %v1080
        %v1082 = vpop.xlane.xlu0 %1081
        %v1083 = vpack.c.bf16 %v1076, %v1074
        %v1084 = vpack.c.bf16 %v964, %v961
        %v1086 = vsel %vm1064, %v1083, 0
        %1088 = vmatprep.subr.bf16.mxu0 0
        %1089 = vmatpush1.bf16.msra.mxu0 %v1084
        %1090 = vmatprep.subr.bf16.mxu0 0
        %1091 = vmatpush1.bf16.msra.mxu0 0
        %1092 = vmatprep.subr.bf16.mxu0 0
        %1093 = vmatpush1.bf16.msra.mxu0 0
        %1094 = vmatprep.subr.bf16.mxu0 0
        %1095 = vmatpush1.bf16.msra.mxu0 0
        %1096 = vmatprep.subr.bf16.mxu0 0
        %1097 = vmatpush1.bf16.msra.mxu0 0
        %1098 = vmatprep.subr.bf16.mxu0 0
        %1099 = vmatpush1.bf16.msra.mxu0 0
        %1100 = vmatprep.subr.bf16.mxu0 0
        %1101 = vmatpush1.bf16.msra.mxu0 0
        %1102 = vmatprep.subr.bf16.mxu0 0
        %1103 = vmatpush1.bf16.msra.mxu0 0
        %1104 = vmatprep.subr.bf16.mxu0 0
        %1105 = vmatpush1.bf16.msra.mxu0 0
        %1106 = vmatprep.subr.bf16.mxu0 0
        %1107 = vmatpush1.bf16.msra.mxu0 0
        %1108 = vmatprep.subr.bf16.mxu0 0
        %1109 = vmatpush1.bf16.msra.mxu0 0
        %1110 = vmatprep.subr.bf16.mxu0 0
        %1111 = vmatpush1.bf16.msra.mxu0 0
        %1112 = vmatprep.subr.bf16.mxu0 0
        %1113 = vmatpush1.bf16.msra.mxu0 0
        %1114 = vmatprep.subr.bf16.mxu0 0
        %1115 = vmatpush1.bf16.msra.mxu0 0
        %1116 = vmatprep.subr.bf16.mxu0 0
        %1117 = vmatpush1.bf16.msra.mxu0 0
        %1118 = vmatprep.subr.bf16.mxu0 0
        %1119 = vmatpush1.bf16.msra.mxu0 0
        %1120 = vmatprep.mubr.bf16.mxu0 0
        %1121 = vmatmul.mubr.bf16.gmra.mrb[0].mxu0 %v1086
        %v1122 = vpop.f32.mrb[0].mxu0
        %v1123 = vadd.f32 0.0, %v1122
        %v1124 = vpop.f32.mrb[0].mxu0
        %v1125 = vpop.f32.mrb[0].mxu0
        %v1126 = vadd.f32 0.0, %v1125
        %v1127 = vpop.f32.mrb[0].mxu0
        %1128 = vdwg.mxu0
        %v1129 = vrcp.pop %v1079
        %v1130 = vrcp.pop %v1082
        %v1131 = vmul.f32 %v1123, %v1129
        %v1132 = vmul.f32 %v1126, %v1130
        %1133 = vst [vmem:[%s516] sm:$0xff] %v1131
        %1134 = vst [vmem:[%s516 + $0x8] sm:$0xff] %v1132
        %s1135 = sand.u32 %s232, 1
        %s1136 = scalar_lea.sflag [#allocation4], %s1135
        %s1137 = sand.u32 %s232, 1
        %s1138 = smul.addr %s1137, 16
        %s1139 = scalar_lea.vmem [#allocation3], %s1138
        // Predicated region
        $region79: #{attention_forward.1} parent=73 // pred_check
          %p1140 = pneg %p242
        $region80: #{attention_forward.1} parent=73 // pred_check_branch
          %1142 = sbr.rel (%p1140) target = $region82
        $region81: #{attention_forward.1} parent=73 // pred_region
          %s1144 = ssub.s32 256, 256
          %1145 = vsyncadd %s1136, %s1144
          %s1146 = smul.addr %s26, 4
          %s1147 = sadd.s32 %s27, %s1146
          %s1148 = smul.addr %s1147, 128
          %s1149 = scalar_lea.hbm %s8, %s1148
          %s1150 = sshll.u32 %s1139, 4
          %s1151 = int_to_ptr.vmem [resolvable:$true] %s1150
          %1156 = dma.vmem_to_hbm [thread:$0]  %s1151, 256, %s1149, %s1136, 128, 256, 8
        $region82: #{attention_forward.1} parent=73 // pred_fallthru
          _
      $region74: #{attention_forward.1} parent=5 // pred_fallthru
        _
      %p1157 = scmp.le.s32.totalorder 2, %s17
      // Predicated region
      $region83: #{attention_forward.1} parent=5 // pred_check
        %p1158 = pneg %p1157
      $region84: #{attention_forward.1} parent=5 // pred_check_branch
        %1160 = sbr.rel (%p1158) target = $region86
      $region85: #{attention_forward.1} parent=5 // pred_region
        %s1161 = ssub.s32 %s17, 2
        // Predicated region
        $region87: #{attention_forward.1} parent=85 // pred_check
          %p1162 = pneg %p248
        $region88: #{attention_forward.1} parent=85 // pred_check_branch
          %1164 = sbr.rel (%p1162) target = $region90
        $region89: #{attention_forward.1} parent=85 // pred_region
          %s1165 = sand.u32 %s233, 1
          %s1166 = scalar_lea.sflag [#allocation4], %s1165
          %s1167 = sand.u32 %s233, 1
          %s1168 = smul.addr %s1167, 16
          %s1169 = scalar_lea.vmem [#allocation3], %s1168
          %1170 = dma.done %s1166, 256
        $region90: #{attention_forward.1} parent=85 // pred_fallthru
          _
      $region86: #{attention_forward.1} parent=5 // pred_fallthru
        _
    $region6: #{attention_forward.1} parent=1 // loop_footer
      %s21 = sadd.s32 1, %s17
    $region7: #{attention_forward.1} parent=1 // loop_footer_branch
      %16 = sbr.rel target = $region3
    $region8: #{attention_forward.1} parent=1 // loop_exit
      _
    %1171 = vsyncpa [#allocation4], 1
    %s1172 = scalar_lea.sflag [#allocation4], 1
    %1173 = vsyncpa %s1172, 1

</llo_original>
